<compile_context>
chip_gen: v5e
topology: v5e:2x2
jax: 0.10.0
libtpu: 0.0.40
codegen_flags: <defaults>
</compile_context>

<pallas_src>
import functools

import jax
import jax.numpy as jnp
from jax.experimental import pallas as pl
from jax.experimental.pallas import tpu as pltpu


def _round_up(x: int, m: int) -> int:
    return ((x + m - 1) // m) * m


def _choose_tile(padded: int, cap: int, align: int) -> int:
    """Largest multiple of `align` that divides `padded` and is <= cap."""
    cap = max(align, min(cap, padded))
    t = (cap // align) * align
    while t > align and padded % t:
        t -= align
    return t


def _linear_act_kernel(x_ref, w_ref, b_ref, o_ref, *, activation: str, out_valid: int):
    """One (tm, tn) output tile, accumulated in-place over the K grid axis."""
    k = pl.program_id(2)

    @pl.when(k == 0)
    def _init():
        o_ref[...] = jnp.zeros_like(o_ref)

    # MXU matmul: bf16 operands, f32 accumulation directly into the (resident)
    # f32 output tile.
    o_ref[...] += jnp.dot(x_ref[...], w_ref[...], preferred_element_type=jnp.float32)

    @pl.when(k == pl.num_programs(2) - 1)
    def _epilogue():
        y = o_ref[...] + b_ref[...]          # bias applied exactly once

        if activation == "identity":
            pass
        elif activation == "relu":
            y = jnp.maximum(y, 0.0)
        elif activation == "tanh":
            y = jnp.tanh(y)
        elif activation == "softmax":
            # Full (padded) feature axis lives in this tile (tn == Np).
            # Mask padded columns with a large finite negative so they drop out
            # of the row max / denominator without any inf arithmetic.
            col = jax.lax.broadcasted_iota(jnp.int32, y.shape, 1)
            y = jnp.where(col < out_valid, y, jnp.float32(-1e30))
            m = jnp.max(y, axis=-1, keepdims=True)
            e = jnp.exp(y - m)
            y = e / jnp.sum(e, axis=-1, keepdims=True)   # exact divide (parity)
        else:
            raise ValueError(f"unknown activation {activation}")

        o_ref[...] = y.astype(o_ref.dtype)


@functools.partial(jax.jit, static_argnames=("activation", "valid_out"))
def _linear_forward_padded(x, w_p, b_p, *, activation: str, valid_out: int):
    """x: (B, In) f32; w_p: (Kp, Np) bf16 pre-padded; b_p: (1, Np) f32 pre-padded."""
    B, In = x.shape
    Kp, Np = w_p.shape
    assert In <= Kp

    # Pad activations to hardware alignment only (M -> 16 for bf16 sublanes,
    # K -> the weight's pre-padded Kp). Zero padding is numerically inert.
    Mp = _round_up(max(B, 1), 16)
    x_p = jnp.pad(x, ((0, Mp - B), (0, Kp - In))).astype(jnp.bfloat16)

    # ---- tile selection: divisors of the padded dims, single block if it fits ----
    if activation == "softmax":
        # Row-wise softmax needs the whole feature axis in one tile.
        # TODO(synk): online-softmax (running max/sum + acc rescale) over a
        # tiled N axis for very wide outputs to bound VMEM on v7x (64 MiB/TC).
        tn = Np
        tm_cap, tk_cap = (512, 512) if Np <= 2048 else (128, 256)
        tm = _choose_tile(Mp, tm_cap, 16)
        tk = _choose_tile(Kp, tk_cap, 128)
    else:
        tm = _choose_tile(Mp, 512, 16)
        tn = _choose_tile(Np, 1024, 128)
        tk = _choose_tile(Kp, 1024, 128)
        # v7x has 2 TensorCores: if the (M, N) grid would be 1x1, split N so the
        # second core gets work (only when tiles stay MXU-efficient >=128 lanes).
        if (Mp // tm) * (Np // tn) == 1 and tn % 256 == 0:
            tn //= 2

    grid = (Mp // tm, Np // tn, Kp // tk)

    kernel = functools.partial(_linear_act_kernel, activation=activation,
                               out_valid=valid_out)

    cost = pl.CostEstimate(
        flops=2 * B * In * valid_out,
        bytes_accessed=2 * (Mp * Kp + Kp * Np) + 4 * (Mp * Np + Np),
        transcendentals=(B * valid_out) if activation in ("tanh", "softmax") else 0,
    )

    out_p = pl.pallas_call(
        kernel,
        out_shape=jax.ShapeDtypeStruct((Mp, Np), jnp.float32),
        grid_spec=pltpu.PrefetchScalarGridSpec(
            num_scalar_prefetch=0,
            grid=grid,
            in_specs=[
                pl.BlockSpec((tm, tk), lambda i, j, k: (i, k)),   # x tile   (bf16)
                pl.BlockSpec((tk, tn), lambda i, j, k: (k, j)),   # w^T tile (bf16)
                pl.BlockSpec((1, tn), lambda i, j, k: (0, j)),    # bias tile (f32)
            ],
            out_specs=pl.BlockSpec((tm, tn), lambda i, j, k: (i, j)),
        ),
        compiler_params=pltpu.CompilerParams(
            dimension_semantics=("parallel", "parallel", "arbitrary"),
            vmem_limit_bytes=48 * 1024 * 1024,
        ),
        cost_estimate=cost,
    )(x_p, w_p, b_p)

    return out_p[:B, :valid_out]


class LinearLayerPallas:
    """Mirrors rlcycle LinearLayer: nn.Linear(input_size, output_size) + post-activation."""

    def __init__(self, input_size: int, output_size: int, post_activation_fn: str,
                 init_w: float = None, key=None):
        assert post_activation_fn in ("identity", "relu", "tanh", "softmax")
        self.afn_name = post_activation_fn
        self.input_size = input_size
        self.output_size = output_size
        if key is None:
            key = jax.random.PRNGKey(0)
        kw, kb = jax.random.split(key)
        if init_w is not None:
            bound = float(init_w)
        else:
            # torch nn.Linear default: U(-1/sqrt(in), 1/sqrt(in)) for weight and bias.
            bound = 1.0 / (input_size ** 0.5)
        # torch weight is (out, in); store transposed (in, out) for the kernel.
        w = jax.random.uniform(kw, (output_size, input_size), jnp.float32, -bound, bound)
        self.w_t = jnp.transpose(w)                                   # f32 master copy
        self.b = jax.random.uniform(kb, (output_size,), jnp.float32, -bound, bound)

        # Pre-pad + pre-cast ONCE (review: no per-forward jnp.pad of the weight).
        Kp = _round_up(input_size, 128)
        Np = _round_up(output_size, 128)
        self._w_p = jnp.pad(self.w_t, ((0, Kp - input_size), (0, Np - output_size))
                            ).astype(jnp.bfloat16)                    # (Kp, Np) bf16
        self._b_p = jnp.pad(self.b.reshape(1, output_size),
                            ((0, 0), (0, Np - output_size)))          # (1, Np) f32

    def __call__(self, x: jax.Array) -> jax.Array:
        return _linear_forward_padded(x, self._w_p, self._b_p,
                                      activation=self.afn_name,
                                      valid_out=self.output_size)


if __name__ == "__main__":
    key = jax.random.PRNGKey(0)
    kx, kp = jax.random.split(key)

    batch, input_size, output_size = 8, 32, 16
    x = jax.random.normal(kx, (batch, input_size), jnp.float32)

    for afn in ("identity", "relu", "tanh", "softmax"):
        layer = LinearLayerPallas(input_size, output_size, afn, init_w=0.1, key=kp)
        y = layer(x)
        jax.block_until_ready(y)

        # Plain-JAX reference on the same bf16-rounded operands (the kernel feeds
        # the MXU bf16 x/W with an exact f32 accumulator and f32 bias).
        x_eff = x.astype(jnp.bfloat16).astype(jnp.float32)
        w_eff = layer.w_t.astype(jnp.bfloat16).astype(jnp.float32)
        y_ref = x_eff @ w_eff + layer.b
        if afn == "relu":
            y_ref = jnp.maximum(y_ref, 0.0)
        elif afn == "tanh":
            y_ref = jnp.tanh(y_ref)
        elif afn == "softmax":
            y_ref = jax.nn.softmax(y_ref, axis=1)

        assert y.shape == (batch, output_size), (afn, y.shape)
        assert bool(jnp.all(jnp.isfinite(y))), f"non-finite output for {afn}"
        assert jnp.allclose(y, y_ref, atol=5e-4, rtol=5e-4), f"mismatch for {afn}"

    print("KERNEL_OK")
</pallas_src>

<mosaic_0001>
module attributes {stable_mosaic.version = 11 : i64} {
  func.func @_linear_act_kernel(%arg0: i32, %arg1: i32, %arg2: i32, %arg3: memref<16x128xbf16, #tpu.memory_space<vmem>>, %arg4: memref<128x128xbf16, #tpu.memory_space<vmem>>, %arg5: memref<1x128xf32, #tpu.memory_space<vmem>>, %arg6: memref<16x128xf32, #tpu.memory_space<vmem>>) attributes {dimension_semantics = [#tpu.dimension_semantics<parallel>, #tpu.dimension_semantics<parallel>, #tpu.dimension_semantics<arbitrary>], iteration_bounds = array<i64: 1, 1, 1>, scalar_prefetch = 0 : i64, scratch_operands = 0 : i64, tpu.core_type = #tpu.core_type<tc>, window_params = [{transform_indices = @transform_0, window_bounds = array<i64: 16, 128>}, {transform_indices = @transform_1, window_bounds = array<i64: 128, 128>}, {transform_indices = @transform_2, window_bounds = array<i64: 1, 128>}, {transform_indices = @transform_3, window_bounds = array<i64: 16, 128>}]} {
    %c0_i32 = arith.constant 0 : i32
    %0 = arith.cmpi eq, %arg2, %c0_i32 : i32
    %1 = arith.extui %0 : i1 to i32
    %c0_i32_0 = arith.constant 0 : i32
    %2 = arith.cmpi ne, %1, %c0_i32_0 : i32
    scf.if %2 {
      %cst_10 = arith.constant 0.000000e+00 : f32
      %12 = vector.broadcast %cst_10 : f32 to vector<16x128xf32>
      %c0_11 = arith.constant 0 : index
      %c0_12 = arith.constant 0 : index
      %13 = vector.load %arg6[%c0_11, %c0_12] : memref<16x128xf32, #tpu.memory_space<vmem>>, vector<16x128xf32>
      tpu.vector_store %arg6[%c0_11, %c0_12], %12 {strides = array<i32>} : memref<16x128xf32, #tpu.memory_space<vmem>>, vector<16x128xf32>,
    } else {
    }
    %c0 = arith.constant 0 : index
    %c0_1 = arith.constant 0 : index
    %3 = vector.load %arg6[%c0, %c0_1] : memref<16x128xf32, #tpu.memory_space<vmem>>, vector<16x128xf32>
    %c0_2 = arith.constant 0 : index
    %c0_3 = arith.constant 0 : index
    %4 = vector.load %arg3[%c0_2, %c0_3] : memref<16x128xbf16, #tpu.memory_space<vmem>>, vector<16x128xbf16>
    %c0_4 = arith.constant 0 : index
    %c0_5 = arith.constant 0 : index
    %5 = vector.load %arg4[%c0_4, %c0_5] : memref<128x128xbf16, #tpu.memory_space<vmem>>, vector<128x128xbf16>
    %cst = arith.constant dense<0.000000e+00> : vector<16x128xf32>
    %6 = tpu.matmul %4, %5, %cst {dimension_numbers = #tpu.dot_dimension_numbers<[1], [0], [0], [1], [0, 0, 1, 1], [], []>} : vector<16x128xbf16>, vector<128x128xbf16>, vector<16x128xf32> -> vector<16x128xf32>
    %7 = arith.addf %3, %6 : vector<16x128xf32>
    %c0_6 = arith.constant 0 : index
    %c0_7 = arith.constant 0 : index
    %8 = vector.load %arg6[%c0_6, %c0_7] : memref<16x128xf32, #tpu.memory_space<vmem>>, vector<16x128xf32>
    tpu.vector_store %arg6[%c0_6, %c0_7], %7 {strides = array<i32>} : memref<16x128xf32, #tpu.memory_space<vmem>>, vector<16x128xf32>,
    %c0_i32_8 = arith.constant 0 : i32
    %9 = arith.cmpi eq, %arg2, %c0_i32_8 : i32
    %10 = arith.extui %9 : i1 to i32
    %c0_i32_9 = arith.constant 0 : i32
    %11 = arith.cmpi ne, %10, %c0_i32_9 : i32
    scf.if %11 {
      %c0_10 = arith.constant 0 : index
      %c0_11 = arith.constant 0 : index
      %12 = vector.load %arg6[%c0_10, %c0_11] : memref<16x128xf32, #tpu.memory_space<vmem>>, vector<16x128xf32>
      %c0_12 = arith.constant 0 : index
      %c0_13 = arith.constant 0 : index
      %13 = vector.load %arg5[%c0_12, %c0_13] : memref<1x128xf32, #tpu.memory_space<vmem>>, vector<1x128xf32>
      %14 = vector.broadcast %13 : vector<1x128xf32> to vector<16x128xf32>
      %15 = arith.addf %12, %14 : vector<16x128xf32>
      %c0_14 = arith.constant 0 : index
      %c0_15 = arith.constant 0 : index
      %16 = vector.load %arg6[%c0_14, %c0_15] : memref<16x128xf32, #tpu.memory_space<vmem>>, vector<16x128xf32>
      tpu.vector_store %arg6[%c0_14, %c0_15], %15 {strides = array<i32>} : memref<16x128xf32, #tpu.memory_space<vmem>>, vector<16x128xf32>,
    } else {
    }
    return
  }
  func.func @transform_0(%arg0: i32, %arg1: i32, %arg2: i32) -> (i32, i32) {
    %c0_i32 = arith.constant 0 : i32
    return %arg0, %arg2 : i32, i32
  }
  func.func @transform_1(%arg0: i32, %arg1: i32, %arg2: i32) -> (i32, i32) {
    %c0_i32 = arith.constant 0 : i32
    return %arg2, %arg1 : i32, i32
  }
  func.func @transform_2(%arg0: i32, %arg1: i32, %arg2: i32) -> (i32, i32) {
    %c0_i32 = arith.constant 0 : i32
    %c0_i32_0 = arith.constant 0 : i32
    return %c0_i32, %arg1 : i32, i32
  }
  func.func @transform_3(%arg0: i32, %arg1: i32, %arg2: i32) -> (i32, i32) {
    %c0_i32 = arith.constant 0 : i32
    return %arg0, %arg1 : i32, i32
  }
}

</mosaic_0001>

<llo_original>
// kernel: _linear_forward_padded.1
$region0: #{_linear_forward_padded.1}
  #allocation0 [shape = 'u32[]', space=smem, size = 0x4, offset = 0x4, fixed_abs, tag = 'smem constant byte address 0x4 - core index']
  #allocation1 [shape = 'u32[72,128]{1,0:T(1,128)}', space=vmem, size = 0x9000, scoped, tag = 'internal scratch']
  %s0 = inlined_call_operand.vmem [shape: bf16[16,128], index: 0, kind: input, shape index: {}]
  %s1 = inlined_call_operand.hbm [shape: bf16[128,128], index: 1, kind: input, shape index: {}]
  %s2 = inlined_call_operand.vmem [shape: f32[1,128], index: 2, kind: input, shape index: {}]
  %s3 = inlined_call_operand.vmem [shape: f32[16,128], index: 3, kind: output, shape index: {}]
  %s4 = sld [smem:[#allocation0]]
  $region34: #{_linear_forward_padded.1} parent=0
    _
  %s6 = ssub.s32 1, %s4
  %s7 = scalar_select 0, %s6, %s4
  $region1: #{_linear_forward_padded.1} parent=0
    #allocation2 [shape = 'u8[32768]{0}', space=vmem, size = 0x8000, scoped, tag = 'input window, operand 1, single buffered']
    #allocation3 [shape = 's32[1]{0}', space=sflag, size = 0x4, scoped, tag = 'scoped memory for _linear_forward_padded.1']
    %8 = vsyncpa [#allocation3], 0
    // Predicated region
    $region2: #{_linear_forward_padded.1} parent=1 // pred_check
      _
    $region3: #{_linear_forward_padded.1} parent=1 // pred_check_branch
      %10 = sbr.rel (0) target = $region5
    $region4: #{_linear_forward_padded.1} parent=1 // pred_region
      _
    $region5: #{_linear_forward_padded.1} parent=1 // pred_fallthru
      _
    // Predicated region
    $region6: #{_linear_forward_padded.1} parent=1 // pred_check
      _
    $region7: #{_linear_forward_padded.1} parent=1 // pred_check_branch
      %12 = sbr.rel (0) target = $region9
    $region8: #{_linear_forward_padded.1} parent=1 // pred_region
      %14 = vsyncadd [#allocation3], 0
      %s15 = sshll.u32 %s1, 4
      %s16 = int_to_ptr.hbm [resolvable:$true] %s15
      %s17 = sshll.u32 [#allocation2], 4
      %s18 = int_to_ptr.vmem [resolvable:$true] %s17
      %23 = dma.hbm_to_vmem [thread:$0]  %s16, 1024, %s18, [#allocation3], 64, 64, 4
    $region9: #{_linear_forward_padded.1} parent=1 // pred_fallthru
      _
    // Predicated region
    $region10: #{_linear_forward_padded.1} parent=1 // pred_check
      _
    $region11: #{_linear_forward_padded.1} parent=1 // pred_check_branch
      %25 = sbr.rel (0) target = $region13
    $region12: #{_linear_forward_padded.1} parent=1 // pred_region
      _
    $region13: #{_linear_forward_padded.1} parent=1 // pred_fallthru
      _
    // Predicated region
    $region14: #{_linear_forward_padded.1} parent=1 // pred_check
      _
    $region15: #{_linear_forward_padded.1} parent=1 // pred_check_branch
      %27 = sbr.rel (0) target = $region17
    $region16: #{_linear_forward_padded.1} parent=1 // pred_region
      %29 = dma.done [#allocation3], 1024
    $region17: #{_linear_forward_padded.1} parent=1 // pred_fallthru
      _
    %p30 = scmp.eq.s32.totalorder 0, 0
    // Predicated region
    $region18: #{_linear_forward_padded.1} parent=1 // pred_check
      %p31 = pneg %p30
    $region19: #{_linear_forward_padded.1} parent=1 // pred_check_branch
      %33 = sbr.rel (%p31) target = $region21
    $region20: #{_linear_forward_padded.1} parent=1 // pred_region
      %34 = vst [vmem:[%s3] sm:$0xff] 0.0
      %35 = vst [vmem:[%s3 + $0x8] sm:$0xff] 0.0
    $region21: #{_linear_forward_padded.1} parent=1 // pred_fallthru
      _
    %v36 = vld [vmem:[%s3] sm:$0xff]
    %v37 = vld [vmem:[%s3 + $0x8] sm:$0xff]
    %v38 = vld [vmem:[%s0] sm:$0xf]
    %v39 = vld [vmem:[%s0 + $0x4] sm:$0xf]
    %v40 = vld [vmem:[#allocation2] sm:$0xf]
    %v41 = vld [vmem:[#allocation2 + $0x4] sm:$0xf]
    %v42 = vld [vmem:[#allocation2 + $0x8] sm:$0xf]
    %v43 = vld [vmem:[#allocation2 + $0xc] sm:$0xf]
    %v44 = vld [vmem:[#allocation2 + $0x10] sm:$0xf]
    %v45 = vld [vmem:[#allocation2 + $0x14] sm:$0xf]
    %v46 = vld [vmem:[#allocation2 + $0x18] sm:$0xf]
    %v47 = vld [vmem:[#allocation2 + $0x1c] sm:$0xf]
    %v48 = vld [vmem:[#allocation2 + $0x20] sm:$0xf]
    %v49 = vld [vmem:[#allocation2 + $0x24] sm:$0xf]
    %v50 = vld [vmem:[#allocation2 + $0x28] sm:$0xf]
    %v51 = vld [vmem:[#allocation2 + $0x2c] sm:$0xf]
    %v52 = vld [vmem:[#allocation2 + $0x30] sm:$0xf]
    %v53 = vld [vmem:[#allocation2 + $0x34] sm:$0xf]
    %v54 = vld [vmem:[#allocation2 + $0x38] sm:$0xf]
    %v55 = vld [vmem:[#allocation2 + $0x3c] sm:$0xf]
    %v58 = vunpack.c.l.b16 %v38
    %v59 = vunpack.c.l.b16 %v39
    %v60 = vpack.c.b16 %v59, %v58
    %v78 = vunpack.c.l.b16 %v40
    %v79 = vunpack.c.l.b16 %v41
    %v80 = vunpack.c.l.b16 %v42
    %v81 = vunpack.c.l.b16 %v43
    %v82 = vunpack.c.l.b16 %v44
    %v83 = vunpack.c.l.b16 %v45
    %v84 = vunpack.c.l.b16 %v46
    %v85 = vunpack.c.l.b16 %v47
    %v86 = vunpack.c.l.b16 %v48
    %v87 = vunpack.c.l.b16 %v49
    %v88 = vunpack.c.l.b16 %v50
    %v89 = vunpack.c.l.b16 %v51
    %v90 = vunpack.c.l.b16 %v52
    %v91 = vunpack.c.l.b16 %v53
    %v92 = vunpack.c.l.b16 %v54
    %v93 = vunpack.c.l.b16 %v55
    %v94 = vpack.c.b16 %v79, %v78
    %v95 = vpack.c.b16 %v81, %v80
    %v96 = vpack.c.b16 %v83, %v82
    %v97 = vpack.c.b16 %v85, %v84
    %v98 = vpack.c.b16 %v87, %v86
    %v99 = vpack.c.b16 %v89, %v88
    %v100 = vpack.c.b16 %v91, %v90
    %v101 = vpack.c.b16 %v93, %v92
    %110 = vmatpush.bf16.msra.mxu0 %v101
    %111 = vmatpush.bf16.msra.mxu0 %v100
    %112 = vmatpush.bf16.msra.mxu0 %v99
    %113 = vmatpush.bf16.msra.mxu0 %v98
    %114 = vmatpush.bf16.msra.mxu0 %v97
    %115 = vmatpush.bf16.msra.mxu0 %v96
    %116 = vmatpush.bf16.msra.mxu0 %v95
    %117 = vmatpush.bf16.msra.mxu0 %v94
    %118 = vmatmul.bf16.gmra.mxu0 %v60
    %v119 = vpop.f32.mrf.mxu0
    %v120 = vadd.f32 0.0, %v119
    %v121 = vpop.f32.mrf.mxu0
    %v122 = vadd.f32 0.0, %v121
    %123 = vdwg.mxu0
    %v124 = vadd.f32 %v36, %v120
    %v125 = vadd.f32 %v37, %v122
    %126 = vst [vmem:[%s3] sm:$0xff] %v124
    %127 = vst [vmem:[%s3 + $0x8] sm:$0xff] %v125
    // Predicated region
    $region22: #{_linear_forward_padded.1} parent=1 // pred_check
      %p128 = pneg %p30
    $region23: #{_linear_forward_padded.1} parent=1 // pred_check_branch
      %130 = sbr.rel (%p128) target = $region25
    $region24: #{_linear_forward_padded.1} parent=1 // pred_region
      %v131 = vld [vmem:[%s3] sm:$0xff]
      %v132 = vld [vmem:[%s3 + $0x8] sm:$0xff]
      %v133 = vld [vmem:[%s2] sm:$0x1]
      %v135 = vperm.slane %v133, 0
      %v137 = vadd.f32 %v131, %v135
      %v138 = vadd.f32 %v132, %v135
      %139 = vst [vmem:[%s3] sm:$0xff] %v137
      %140 = vst [vmem:[%s3 + $0x8] sm:$0xff] %v138
    $region25: #{_linear_forward_padded.1} parent=1 // pred_fallthru
      _
    // Predicated region
    $region26: #{_linear_forward_padded.1} parent=1 // pred_check
      _
    $region27: #{_linear_forward_padded.1} parent=1 // pred_check_branch
      %142 = sbr.rel (0) target = $region29
    $region28: #{_linear_forward_padded.1} parent=1 // pred_region
      _
    $region29: #{_linear_forward_padded.1} parent=1 // pred_fallthru
      _
    // Predicated region
    $region30: #{_linear_forward_padded.1} parent=1 // pred_check
      _
    $region31: #{_linear_forward_padded.1} parent=1 // pred_check_branch
      %144 = sbr.rel (0) target = $region33
    $region32: #{_linear_forward_padded.1} parent=1 // pred_region
      _
    $region33: #{_linear_forward_padded.1} parent=1 // pred_fallthru
      _
    %145 = vsyncpa [#allocation3], 1

</llo_original>
